<compile_context>
chip_gen: v7x
topology: tpu7x:2x2x1
jax: 0.10.0
libtpu: 0.0.40
codegen_flags: <defaults>
</compile_context>

<pallas_src>
import functools

import jax
import jax.numpy as jnp
import numpy as np
from jax import lax
from jax.experimental import pallas as pl
from jax.experimental.pallas import tpu as pltpu

_LANE = 128
# Target for the live fori_loop carry (2 f32 accumulators); vreg file is 256 KiB.
_ACC_VREG_BUDGET = 96 * 1024


def _round_up(n, m):
    return ((n + m - 1) // m) * m


def _tpu_vmem_capacity_bytes():
    """Per-core VMEM capacity; conservative fallback if the query is unavailable."""
    try:
        return int(pltpu.get_tpu_info().vmem_capacity_bytes)
    except Exception:
        return 64 * 1024 * 1024  # v7x per-TC VMEM (most conservative real value)


def _corner_mul_kernel(xr_ref, xi_ref, wr_ref, wi_ref, or_ref, oi_ref, *, tm_sub):
    """Complex contraction over input channels for one (corner, mtile, btile).

    xr/xi : (1, BB, Cin, TM)   real / imag of the x_ft corner slab (f32)
    wr/wi : (1, Cin, Cout, TM) real / imag of the corner weights (bf16 storage)
    or/oi : (1, BB, Cout, TM)  real / imag of the out_ft corner slab (f32)
    out[b, o, m] = sum_i x[b, i, m] * w[i, o, m]   (complex)

    The mode axis is processed in TM_SUB-lane sub-chunks so the live f32
    accumulator pair stays within the vreg budget (no register spilling).
    """
    _, bb, cin, tm = xr_ref.shape
    cout = or_ref.shape[2]
    n_sub = tm // tm_sub
    unroll = min(cin, 8)

    for j in range(n_sub):  # static loop; each chunk's accumulator is stored immediately
        lo = j * tm_sub

        def body(i, carry, lo=lo):
            acc_r, acc_i = carry
            xr_i = xr_ref[0, :, pl.ds(i, 1), pl.ds(lo, tm_sub)]      # (BB, 1, TM_SUB)
            xi_i = xi_ref[0, :, pl.ds(i, 1), pl.ds(lo, tm_sub)]      # (BB, 1, TM_SUB)
            wr_i = wr_ref[0, pl.ds(i, 1), :, pl.ds(lo, tm_sub)]      # (1, Cout, TM_SUB)
            wi_i = wi_ref[0, pl.ds(i, 1), :, pl.ds(lo, tm_sub)]      # (1, Cout, TM_SUB)
            wr_f = wr_i.astype(jnp.float32)   # upcast bf16 storage before VPU math
            wi_f = wi_i.astype(jnp.float32)
            acc_r = acc_r + (xr_i * wr_f - xi_i * wi_f)
            acc_i = acc_i + (xr_i * wi_f + xi_i * wr_f)
            return acc_r, acc_i

        zeros = jnp.zeros((bb, cout, tm_sub), jnp.float32)
        out_r, out_i = lax.fori_loop(0, cin, body, (zeros, zeros), unroll=unroll)
        or_ref[0, :, :, pl.ds(lo, tm_sub)] = out_r
        oi_ref[0, :, :, pl.ds(lo, tm_sub)] = out_i


def _corner_mul_pallas(xr, xi, wr, wi):
    """xr, xi: (4, B, Cin, M_pad) f32;  wr, wi: (4, Cin, Cout, M_pad) bf16/f32.

    Returns (out_r, out_i): (4, B, Cout, M_pad) f32.
    """
    n_corner, B, Cin, M_pad = xr.shape
    Cout = wr.shape[2]
    assert M_pad % _LANE == 0
    assert wr.shape == (n_corner, Cin, Cout, M_pad)
    wbytes = jnp.dtype(wr.dtype).itemsize

    # --- per-generation VMEM budgets (v5e/v6e: 128 MiB -> 96/48/16 MiB,
    #     v7x: 64 MiB per TC -> 48/24/8 MiB).
    vmem_cap = _tpu_vmem_capacity_bytes()
    vmem_limit_bytes = (vmem_cap * 3) // 4
    weight_budget_bytes = (vmem_cap * 3) // 8
    act_budget_bytes = vmem_cap // 8

    # --- mode tile TM: largest lane-multiple divisor of M_pad whose weight
    # tile (real + imag, x2 pipeline buffers) stays under budget.  bf16
    # storage halves this, letting TM (and hence weight-DMA reuse) grow.
    def weight_tile_bytes(tm):
        return 2 * 2 * Cin * Cout * tm * wbytes

    TM = _LANE
    t = _LANE
    while t <= M_pad:
        if M_pad % t == 0 and weight_tile_bytes(t) <= weight_budget_bytes:
            TM = t
        t += _LANE
    n_mtiles = M_pad // TM

    # --- batch tile BB: fold as much batch as the activation budget allows
    # into one grid step, but cap BB so that even the minimum 128-lane
    # accumulator chunk (2 * BB * Cout * 128 * 4 bytes) fits the vreg budget.
    def act_tile_bytes(bb):
        # x tiles (r/i, double-buffered) + out tiles (r/i, double-buffered), f32.
        return 2 * 2 * bb * Cin * TM * 4 + 2 * 2 * bb * Cout * TM * 4

    BB = 1
    for bb in range(1, B + 1):
        if (B % bb == 0
                and act_tile_bytes(bb) <= act_budget_bytes
                and 2 * bb * Cout * _LANE * 4 <= _ACC_VREG_BUDGET):
            BB = bb
    n_btiles = B // BB

    # --- in-kernel mode sub-chunk: largest lane-multiple divisor of TM whose
    # live accumulator pair fits the vreg budget (the VMEM tile stays TM-wide
    # for DMA efficiency; only the fori_loop carry shrinks).
    TM_SUB = _LANE
    t = _LANE
    while t <= TM:
        if TM % t == 0 and 2 * BB * Cout * t * 4 <= _ACC_VREG_BUDGET:
            TM_SUB = t
        t += _LANE

    # --- megacore sharding: if the (corner, mtile) parallel space is coarse,
    # split the batch tiles into an outer *parallel* axis (v7x: 2 TCs) while
    # keeping an inner serial batch axis so weight-tile reuse is preserved.
    if n_corner * n_mtiles < 8 and n_btiles % 2 == 0:
        n_bouter = 2
    else:
        n_bouter = 1
    n_binner = n_btiles // n_bouter

    x_spec = pl.BlockSpec((1, BB, Cin, TM),
                          lambda bo, c, mt, bi: (c, bo * n_binner + bi, 0, mt))
    w_spec = pl.BlockSpec((1, Cin, Cout, TM),
                          lambda bo, c, mt, bi: (c, 0, 0, mt))
    o_spec = pl.BlockSpec((1, BB, Cout, TM),
                          lambda bo, c, mt, bi: (c, bo * n_binner + bi, 0, mt))

    kernel = functools.partial(_corner_mul_kernel, tm_sub=TM_SUB)

    out_r, out_i = pl.pallas_call(
        kernel,
        out_shape=(
            jax.ShapeDtypeStruct((n_corner, B, Cout, M_pad), jnp.float32),
            jax.ShapeDtypeStruct((n_corner, B, Cout, M_pad), jnp.float32),
        ),
        grid=(n_bouter, n_corner, n_mtiles, n_binner),
        in_specs=[x_spec, x_spec, w_spec, w_spec],
        out_specs=(o_spec, o_spec),
        compiler_params=pltpu.CompilerParams(
            # batch_outer / corner / mode-tile axes may split across TCs;
            # batch_inner stays innermost & serial so the weight tile (whose
            # index_map ignores it) is reused without re-DMA.
            dimension_semantics=("parallel", "parallel", "parallel", "arbitrary"),
            vmem_limit_bytes=int(vmem_limit_bytes),
        ),
    )(xr, xi, wr, wi)
    return out_r, out_i


class SpectralConv3dPallas:
    """JAX / Pallas port of the PyTorch SpectralConv3d module (forward pass)."""

    def __init__(self, in_channels, out_channels, modes, key, *,
                 weight_dtype=jnp.bfloat16):
        self.in_channels = in_channels
        self.out_channels = out_channels
        self.modes1, self.modes2, self.modes3 = modes
        scale = 1.0 / (in_channels * out_channels)

        wshape = (in_channels, out_channels, self.modes1, self.modes2, self.modes3)
        keys = jax.random.split(key, 8)

        # torch.rand(..., dtype=cfloat) -> independent U[0,1) for real and imag.
        wr_init = jnp.stack(
            [scale * jax.random.uniform(keys[2 * i], wshape, jnp.float32) for i in range(4)], 0)
        wi_init = jnp.stack(
            [scale * jax.random.uniform(keys[2 * i + 1], wshape, jnp.float32) for i in range(4)], 0)

        # Weight storage format for the kernel (bf16 by default: halves weight
        # HBM / VMEM traffic; upcast inside the kernel before the VPU math).
        wr_store = wr_init.astype(weight_dtype)
        wi_store = wi_init.astype(weight_dtype)

        # Effective (storage-rounded) weights as complex64 -- these are what the
        # forward pass computes with, and what the reference path uses, so the
        # numerical check validates the kernel math tightly.
        wr32 = wr_store.astype(jnp.float32)
        wi32 = wi_store.astype(jnp.float32)
        self.weights = [(wr32[k] + 1j * wi32[k]).astype(jnp.complex64) for k in range(4)]

        # Pre-pack kernel weight operands once: (4, Cin, Cout, M_pad), mode axis
        # flattened and zero-padded to a lane multiple, in the storage dtype.
        M = self.modes1 * self.modes2 * self.modes3
        self._M = M
        self._M_pad = _round_up(M, _LANE)
        pad = self._M_pad - M
        wr_pk = wr_store.reshape(4, in_channels, out_channels, M)
        wi_pk = wi_store.reshape(4, in_channels, out_channels, M)
        if pad:
            pads = ((0, 0), (0, 0), (0, 0), (0, pad))
            wr_pk = jnp.pad(wr_pk, pads)
            wi_pk = jnp.pad(wi_pk, pads)
        self._wr = wr_pk
        self._wi = wi_pk

    def __call__(self, x):
        # x: (B, Cin, D1, D2, D3) float32
        B, Cin, D1, D2, D3 = x.shape
        m1, m2, m3 = self.modes1, self.modes2, self.modes3
        Cout = self.out_channels
        M, M_pad = self._M, self._M_pad

        x_ft = jnp.fft.rfftn(x, axes=(-3, -2, -1))          # (B, Cin, D1, D2, D3//2+1)
        ft_size = (D1, D2, D3 // 2 + 1)

        # The 4 retained frequency corners (same slicing as the PyTorch module).
        corners = [
            x_ft[:, :, :m1, :m2, :m3],
            x_ft[:, :, -m1:, :m2, :m3],
            x_ft[:, :, :m1, -m2:, :m3],
            x_ft[:, :, -m1:, -m2:, :m3],
        ]
        xc = jnp.stack(corners, axis=0).reshape(4, B, Cin, M)
        xr = jnp.real(xc).astype(jnp.float32)
        xi = jnp.imag(xc).astype(jnp.float32)
        pad = M_pad - M
        if pad:
            pads = ((0, 0), (0, 0), (0, 0), (0, pad))
            xr = jnp.pad(xr, pads)
            xi = jnp.pad(xi, pads)

        out_r, out_i = _corner_mul_pallas(xr, xi, self._wr, self._wi)
        out_r = out_r[..., :M]
        out_i = out_i[..., :M]
        out_c = (out_r + 1j * out_i).astype(jnp.complex64)          # (4, B, Cout, M)
        out_c = out_c.reshape(4, B, Cout, m1, m2, m3)

        out_ft = jnp.zeros((B, Cout) + ft_size, dtype=jnp.complex64)
        out_ft = out_ft.at[:, :, :m1, :m2, :m3].set(out_c[0])
        out_ft = out_ft.at[:, :, -m1:, :m2, :m3].set(out_c[1])
        out_ft = out_ft.at[:, :, :m1, -m2:, :m3].set(out_c[2])
        out_ft = out_ft.at[:, :, -m1:, -m2:, :m3].set(out_c[3])

        y = jnp.fft.irfftn(out_ft, s=(D1, D2, D3), axes=(-3, -2, -1))
        return y.astype(jnp.float32)


def _reference_forward(module, x):
    """Pure-JAX reference (mirrors the PyTorch forward exactly, using the
    module's effective weights)."""
    B, Cin, D1, D2, D3 = x.shape
    m1, m2, m3 = module.modes1, module.modes2, module.modes3
    Cout = module.out_channels
    x_ft = jnp.fft.rfftn(x, axes=(-3, -2, -1))
    out_ft = jnp.zeros((B, Cout, D1, D2, D3 // 2 + 1), dtype=jnp.complex64)
    cm = lambda a, w: jnp.einsum("bixyz,ioxyz->boxyz", a, w)
    out_ft = out_ft.at[:, :, :m1, :m2, :m3].set(cm(x_ft[:, :, :m1, :m2, :m3], module.weights[0]))
    out_ft = out_ft.at[:, :, -m1:, :m2, :m3].set(cm(x_ft[:, :, -m1:, :m2, :m3], module.weights[1]))
    out_ft = out_ft.at[:, :, :m1, -m2:, :m3].set(cm(x_ft[:, :, :m1, -m2:, :m3], module.weights[2]))
    out_ft = out_ft.at[:, :, -m1:, -m2:, :m3].set(cm(x_ft[:, :, -m1:, -m2:, :m3], module.weights[3]))
    return jnp.fft.irfftn(out_ft, s=(D1, D2, D3), axes=(-3, -2, -1)).astype(jnp.float32)


if __name__ == "__main__":
    key = jax.random.PRNGKey(0)
    k_w, k_x = jax.random.split(key)

    B, Cin, Cout = 2, 4, 4
    D1 = D2 = D3 = 16
    modes = (4, 4, 4)

    module = SpectralConv3dPallas(Cin, Cout, modes, k_w)
    x = jax.random.normal(k_x, (B, Cin, D1, D2, D3), dtype=jnp.float32)

    y = jax.block_until_ready(module(x))
    y_ref = jax.block_until_ready(_reference_forward(module, x))
    np.testing.assert_allclose(np.asarray(y), np.asarray(y_ref), rtol=2e-4, atol=1e-5)

    assert y.shape == (B, Cout, D1, D2, D3)
    print("KERNEL_OK")
</pallas_src>

<mosaic_0001>
module attributes {stable_mosaic.version = 11 : i64} {
  func.func @_corner_mul_kernel(%arg0: i32, %arg1: i32, %arg2: i32, %arg3: i32, %arg4: memref<1x2x4x128xf32, #tpu.memory_space<vmem>>, %arg5: memref<1x2x4x128xf32, #tpu.memory_space<vmem>>, %arg6: memref<1x4x4x128xbf16, #tpu.memory_space<vmem>>, %arg7: memref<1x4x4x128xbf16, #tpu.memory_space<vmem>>, %arg8: memref<1x2x4x128xf32, #tpu.memory_space<vmem>>, %arg9: memref<1x2x4x128xf32, #tpu.memory_space<vmem>>) attributes {dimension_semantics = [#tpu.dimension_semantics<parallel>, #tpu.dimension_semantics<parallel>, #tpu.dimension_semantics<parallel>, #tpu.dimension_semantics<arbitrary>], iteration_bounds = array<i64: 1, 4, 1, 1>, scalar_prefetch = 0 : i64, scratch_operands = 0 : i64, tpu.core_type = #tpu.core_type<tc>, window_params = [{transform_indices = @transform_0, window_bounds = array<i64: 1, 2, 4, 128>}, {transform_indices = @transform_1, window_bounds = array<i64: 1, 2, 4, 128>}, {transform_indices = @transform_2, window_bounds = array<i64: 1, 4, 4, 128>}, {transform_indices = @transform_3, window_bounds = array<i64: 1, 4, 4, 128>}, {transform_indices = @transform_4, window_bounds = array<i64: 1, 2, 4, 128>}, {transform_indices = @transform_5, window_bounds = array<i64: 1, 2, 4, 128>}]} {
    %cst = arith.constant 0.000000e+00 : f32
    %0 = vector.broadcast %cst : f32 to vector<2x4x128xf32>
    %c0_i32 = arith.constant 0 : i32
    %c0 = arith.constant 0 : index
    %c0_0 = arith.constant 0 : index
    %1 = arith.index_cast %c0_i32 : i32 to index
    %c0_1 = arith.constant 0 : index
    %2 = vector.load %arg4[%c0, %c0_0, %1, %c0_1] : memref<1x2x4x128xf32, #tpu.memory_space<vmem>>, vector<1x2x1x128xf32>
    %3 = vector.shape_cast %2 : vector<1x2x1x128xf32> to vector<2x1x128xf32>
    %c0_2 = arith.constant 0 : index
    %c0_3 = arith.constant 0 : index
    %4 = arith.index_cast %c0_i32 : i32 to index
    %c0_4 = arith.constant 0 : index
    %5 = vector.load %arg5[%c0_2, %c0_3, %4, %c0_4] : memref<1x2x4x128xf32, #tpu.memory_space<vmem>>, vector<1x2x1x128xf32>
    %6 = vector.shape_cast %5 : vector<1x2x1x128xf32> to vector<2x1x128xf32>
    %c0_5 = arith.constant 0 : index
    %7 = arith.index_cast %c0_i32 : i32 to index
    %c0_6 = arith.constant 0 : index
    %c0_7 = arith.constant 0 : index
    %8 = vector.load %arg6[%c0_5, %7, %c0_6, %c0_7] : memref<1x4x4x128xbf16, #tpu.memory_space<vmem>>, vector<1x1x4x128xbf16>
    %9 = vector.shape_cast %8 : vector<1x1x4x128xbf16> to vector<1x4x128xbf16>
    %c0_8 = arith.constant 0 : index
    %10 = arith.index_cast %c0_i32 : i32 to index
    %c0_9 = arith.constant 0 : index
    %c0_10 = arith.constant 0 : index
    %11 = vector.load %arg7[%c0_8, %10, %c0_9, %c0_10] : memref<1x4x4x128xbf16, #tpu.memory_space<vmem>>, vector<1x1x4x128xbf16>
    %12 = vector.shape_cast %11 : vector<1x1x4x128xbf16> to vector<1x4x128xbf16>
    %13 = arith.extf %9 : vector<1x4x128xbf16> to vector<1x4x128xf32>
    %14 = arith.extf %12 : vector<1x4x128xbf16> to vector<1x4x128xf32>
    %15 = vector.broadcast %3 : vector<2x1x128xf32> to vector<2x4x128xf32>
    %16 = vector.broadcast %13 : vector<1x4x128xf32> to vector<2x4x128xf32>
    %17 = arith.mulf %15, %16 : vector<2x4x128xf32>
    %18 = vector.broadcast %6 : vector<2x1x128xf32> to vector<2x4x128xf32>
    %19 = vector.broadcast %14 : vector<1x4x128xf32> to vector<2x4x128xf32>
    %20 = arith.mulf %18, %19 : vector<2x4x128xf32>
    %21 = arith.subf %17, %20 : vector<2x4x128xf32>
    %22 = arith.addf %0, %21 : vector<2x4x128xf32>
    %23 = vector.broadcast %3 : vector<2x1x128xf32> to vector<2x4x128xf32>
    %24 = vector.broadcast %14 : vector<1x4x128xf32> to vector<2x4x128xf32>
    %25 = arith.mulf %23, %24 : vector<2x4x128xf32>
    %26 = vector.broadcast %6 : vector<2x1x128xf32> to vector<2x4x128xf32>
    %27 = vector.broadcast %13 : vector<1x4x128xf32> to vector<2x4x128xf32>
    %28 = arith.mulf %26, %27 : vector<2x4x128xf32>
    %29 = arith.addf %25, %28 : vector<2x4x128xf32>
    %30 = arith.addf %0, %29 : vector<2x4x128xf32>
    %c1_i32 = arith.constant 1 : i32
    %c0_11 = arith.constant 0 : index
    %c0_12 = arith.constant 0 : index
    %31 = arith.index_cast %c1_i32 : i32 to index
    %c0_13 = arith.constant 0 : index
    %32 = vector.load %arg4[%c0_11, %c0_12, %31, %c0_13] : memref<1x2x4x128xf32, #tpu.memory_space<vmem>>, vector<1x2x1x128xf32>
    %33 = vector.shape_cast %32 : vector<1x2x1x128xf32> to vector<2x1x128xf32>
    %c0_14 = arith.constant 0 : index
    %c0_15 = arith.constant 0 : index
    %34 = arith.index_cast %c1_i32 : i32 to index
    %c0_16 = arith.constant 0 : index
    %35 = vector.load %arg5[%c0_14, %c0_15, %34, %c0_16] : memref<1x2x4x128xf32, #tpu.memory_space<vmem>>, vector<1x2x1x128xf32>
    %36 = vector.shape_cast %35 : vector<1x2x1x128xf32> to vector<2x1x128xf32>
    %c0_17 = arith.constant 0 : index
    %37 = arith.index_cast %c1_i32 : i32 to index
    %c0_18 = arith.constant 0 : index
    %c0_19 = arith.constant 0 : index
    %38 = vector.load %arg6[%c0_17, %37, %c0_18, %c0_19] : memref<1x4x4x128xbf16, #tpu.memory_space<vmem>>, vector<1x1x4x128xbf16>
    %39 = vector.shape_cast %38 : vector<1x1x4x128xbf16> to vector<1x4x128xbf16>
    %c0_20 = arith.constant 0 : index
    %40 = arith.index_cast %c1_i32 : i32 to index
    %c0_21 = arith.constant 0 : index
    %c0_22 = arith.constant 0 : index
    %41 = vector.load %arg7[%c0_20, %40, %c0_21, %c0_22] : memref<1x4x4x128xbf16, #tpu.memory_space<vmem>>, vector<1x1x4x128xbf16>
    %42 = vector.shape_cast %41 : vector<1x1x4x128xbf16> to vector<1x4x128xbf16>
    %43 = arith.extf %39 : vector<1x4x128xbf16> to vector<1x4x128xf32>
    %44 = arith.extf %42 : vector<1x4x128xbf16> to vector<1x4x128xf32>
    %45 = vector.broadcast %33 : vector<2x1x128xf32> to vector<2x4x128xf32>
    %46 = vector.broadcast %43 : vector<1x4x128xf32> to vector<2x4x128xf32>
    %47 = arith.mulf %45, %46 : vector<2x4x128xf32>
    %48 = vector.broadcast %36 : vector<2x1x128xf32> to vector<2x4x128xf32>
    %49 = vector.broadcast %44 : vector<1x4x128xf32> to vector<2x4x128xf32>
    %50 = arith.mulf %48, %49 : vector<2x4x128xf32>
    %51 = arith.subf %47, %50 : vector<2x4x128xf32>
    %52 = arith.addf %22, %51 : vector<2x4x128xf32>
    %53 = vector.broadcast %33 : vector<2x1x128xf32> to vector<2x4x128xf32>
    %54 = vector.broadcast %44 : vector<1x4x128xf32> to vector<2x4x128xf32>
    %55 = arith.mulf %53, %54 : vector<2x4x128xf32>
    %56 = vector.broadcast %36 : vector<2x1x128xf32> to vector<2x4x128xf32>
    %57 = vector.broadcast %43 : vector<1x4x128xf32> to vector<2x4x128xf32>
    %58 = arith.mulf %56, %57 : vector<2x4x128xf32>
    %59 = arith.addf %55, %58 : vector<2x4x128xf32>
    %60 = arith.addf %30, %59 : vector<2x4x128xf32>
    %c2_i32 = arith.constant 2 : i32
    %c0_23 = arith.constant 0 : index
    %c0_24 = arith.constant 0 : index
    %61 = arith.index_cast %c2_i32 : i32 to index
    %c0_25 = arith.constant 0 : index
    %62 = vector.load %arg4[%c0_23, %c0_24, %61, %c0_25] : memref<1x2x4x128xf32, #tpu.memory_space<vmem>>, vector<1x2x1x128xf32>
    %63 = vector.shape_cast %62 : vector<1x2x1x128xf32> to vector<2x1x128xf32>
    %c0_26 = arith.constant 0 : index
    %c0_27 = arith.constant 0 : index
    %64 = arith.index_cast %c2_i32 : i32 to index
    %c0_28 = arith.constant 0 : index
    %65 = vector.load %arg5[%c0_26, %c0_27, %64, %c0_28] : memref<1x2x4x128xf32, #tpu.memory_space<vmem>>, vector<1x2x1x128xf32>
    %66 = vector.shape_cast %65 : vector<1x2x1x128xf32> to vector<2x1x128xf32>
    %c0_29 = arith.constant 0 : index
    %67 = arith.index_cast %c2_i32 : i32 to index
    %c0_30 = arith.constant 0 : index
    %c0_31 = arith.constant 0 : index
    %68 = vector.load %arg6[%c0_29, %67, %c0_30, %c0_31] : memref<1x4x4x128xbf16, #tpu.memory_space<vmem>>, vector<1x1x4x128xbf16>
    %69 = vector.shape_cast %68 : vector<1x1x4x128xbf16> to vector<1x4x128xbf16>
    %c0_32 = arith.constant 0 : index
    %70 = arith.index_cast %c2_i32 : i32 to index
    %c0_33 = arith.constant 0 : index
    %c0_34 = arith.constant 0 : index
    %71 = vector.load %arg7[%c0_32, %70, %c0_33, %c0_34] : memref<1x4x4x128xbf16, #tpu.memory_space<vmem>>, vector<1x1x4x128xbf16>
    %72 = vector.shape_cast %71 : vector<1x1x4x128xbf16> to vector<1x4x128xbf16>
    %73 = arith.extf %69 : vector<1x4x128xbf16> to vector<1x4x128xf32>
    %74 = arith.extf %72 : vector<1x4x128xbf16> to vector<1x4x128xf32>
    %75 = vector.broadcast %63 : vector<2x1x128xf32> to vector<2x4x128xf32>
    %76 = vector.broadcast %73 : vector<1x4x128xf32> to vector<2x4x128xf32>
    %77 = arith.mulf %75, %76 : vector<2x4x128xf32>
    %78 = vector.broadcast %66 : vector<2x1x128xf32> to vector<2x4x128xf32>
    %79 = vector.broadcast %74 : vector<1x4x128xf32> to vector<2x4x128xf32>
    %80 = arith.mulf %78, %79 : vector<2x4x128xf32>
    %81 = arith.subf %77, %80 : vector<2x4x128xf32>
    %82 = arith.addf %52, %81 : vector<2x4x128xf32>
    %83 = vector.broadcast %63 : vector<2x1x128xf32> to vector<2x4x128xf32>
    %84 = vector.broadcast %74 : vector<1x4x128xf32> to vector<2x4x128xf32>
    %85 = arith.mulf %83, %84 : vector<2x4x128xf32>
    %86 = vector.broadcast %66 : vector<2x1x128xf32> to vector<2x4x128xf32>
    %87 = vector.broadcast %73 : vector<1x4x128xf32> to vector<2x4x128xf32>
    %88 = arith.mulf %86, %87 : vector<2x4x128xf32>
    %89 = arith.addf %85, %88 : vector<2x4x128xf32>
    %90 = arith.addf %60, %89 : vector<2x4x128xf32>
    %c3_i32 = arith.constant 3 : i32
    %c0_35 = arith.constant 0 : index
    %c0_36 = arith.constant 0 : index
    %91 = arith.index_cast %c3_i32 : i32 to index
    %c0_37 = arith.constant 0 : index
    %92 = vector.load %arg4[%c0_35, %c0_36, %91, %c0_37] : memref<1x2x4x128xf32, #tpu.memory_space<vmem>>, vector<1x2x1x128xf32>
    %93 = vector.shape_cast %92 : vector<1x2x1x128xf32> to vector<2x1x128xf32>
    %c0_38 = arith.constant 0 : index
    %c0_39 = arith.constant 0 : index
    %94 = arith.index_cast %c3_i32 : i32 to index
    %c0_40 = arith.constant 0 : index
    %95 = vector.load %arg5[%c0_38, %c0_39, %94, %c0_40] : memref<1x2x4x128xf32, #tpu.memory_space<vmem>>, vector<1x2x1x128xf32>
    %96 = vector.shape_cast %95 : vector<1x2x1x128xf32> to vector<2x1x128xf32>
    %c0_41 = arith.constant 0 : index
    %97 = arith.index_cast %c3_i32 : i32 to index
    %c0_42 = arith.constant 0 : index
    %c0_43 = arith.constant 0 : index
    %98 = vector.load %arg6[%c0_41, %97, %c0_42, %c0_43] : memref<1x4x4x128xbf16, #tpu.memory_space<vmem>>, vector<1x1x4x128xbf16>
    %99 = vector.shape_cast %98 : vector<1x1x4x128xbf16> to vector<1x4x128xbf16>
    %c0_44 = arith.constant 0 : index
    %100 = arith.index_cast %c3_i32 : i32 to index
    %c0_45 = arith.constant 0 : index
    %c0_46 = arith.constant 0 : index
    %101 = vector.load %arg7[%c0_44, %100, %c0_45, %c0_46] : memref<1x4x4x128xbf16, #tpu.memory_space<vmem>>, vector<1x1x4x128xbf16>
    %102 = vector.shape_cast %101 : vector<1x1x4x128xbf16> to vector<1x4x128xbf16>
    %103 = arith.extf %99 : vector<1x4x128xbf16> to vector<1x4x128xf32>
    %104 = arith.extf %102 : vector<1x4x128xbf16> to vector<1x4x128xf32>
    %105 = vector.broadcast %93 : vector<2x1x128xf32> to vector<2x4x128xf32>
    %106 = vector.broadcast %103 : vector<1x4x128xf32> to vector<2x4x128xf32>
    %107 = arith.mulf %105, %106 : vector<2x4x128xf32>
    %108 = vector.broadcast %96 : vector<2x1x128xf32> to vector<2x4x128xf32>
    %109 = vector.broadcast %104 : vector<1x4x128xf32> to vector<2x4x128xf32>
    %110 = arith.mulf %108, %109 : vector<2x4x128xf32>
    %111 = arith.subf %107, %110 : vector<2x4x128xf32>
    %112 = arith.addf %82, %111 : vector<2x4x128xf32>
    %113 = vector.broadcast %93 : vector<2x1x128xf32> to vector<2x4x128xf32>
    %114 = vector.broadcast %104 : vector<1x4x128xf32> to vector<2x4x128xf32>
    %115 = arith.mulf %113, %114 : vector<2x4x128xf32>
    %116 = vector.broadcast %96 : vector<2x1x128xf32> to vector<2x4x128xf32>
    %117 = vector.broadcast %103 : vector<1x4x128xf32> to vector<2x4x128xf32>
    %118 = arith.mulf %116, %117 : vector<2x4x128xf32>
    %119 = arith.addf %115, %118 : vector<2x4x128xf32>
    %120 = arith.addf %90, %119 : vector<2x4x128xf32>
    %c4_i32 = arith.constant 4 : i32
    %c0_47 = arith.constant 0 : index
    %c0_48 = arith.constant 0 : index
    %c0_49 = arith.constant 0 : index
    %c0_50 = arith.constant 0 : index
    %121 = vector.load %arg8[%c0_47, %c0_48, %c0_49, %c0_50] : memref<1x2x4x128xf32, #tpu.memory_space<vmem>>, vector<1x2x4x128xf32>
    %122 = vector.shape_cast %121 : vector<1x2x4x128xf32> to vector<2x4x128xf32>
    %123 = vector.shape_cast %112 : vector<2x4x128xf32> to vector<1x2x4x128xf32>
    tpu.vector_store %arg8[%c0_47, %c0_48, %c0_49, %c0_50], %123 {strides = array<i32>} : memref<1x2x4x128xf32, #tpu.memory_space<vmem>>, vector<1x2x4x128xf32>,
    %c0_51 = arith.constant 0 : index
    %c0_52 = arith.constant 0 : index
    %c0_53 = arith.constant 0 : index
    %c0_54 = arith.constant 0 : index
    %124 = vector.load %arg9[%c0_51, %c0_52, %c0_53, %c0_54] : memref<1x2x4x128xf32, #tpu.memory_space<vmem>>, vector<1x2x4x128xf32>
    %125 = vector.shape_cast %124 : vector<1x2x4x128xf32> to vector<2x4x128xf32>
    %126 = vector.shape_cast %120 : vector<2x4x128xf32> to vector<1x2x4x128xf32>
    tpu.vector_store %arg9[%c0_51, %c0_52, %c0_53, %c0_54], %126 {strides = array<i32>} : memref<1x2x4x128xf32, #tpu.memory_space<vmem>>, vector<1x2x4x128xf32>,
    return
  }
  func.func @transform_0(%arg0: i32, %arg1: i32, %arg2: i32, %arg3: i32) -> (i32, i32, i32, i32) {
    %c1_i32 = arith.constant 1 : i32
    %0 = arith.muli %arg0, %c1_i32 : i32
    %1 = arith.addi %0, %arg3 : i32
    %c0_i32 = arith.constant 0 : i32
    %c0_i32_0 = arith.constant 0 : i32
    return %arg1, %1, %c0_i32, %arg2 : i32, i32, i32, i32
  }
  func.func @transform_1(%arg0: i32, %arg1: i32, %arg2: i32, %arg3: i32) -> (i32, i32, i32, i32) {
    %c1_i32 = arith.constant 1 : i32
    %0 = arith.muli %arg0, %c1_i32 : i32
    %1 = arith.addi %0, %arg3 : i32
    %c0_i32 = arith.constant 0 : i32
    %c0_i32_0 = arith.constant 0 : i32
    return %arg1, %1, %c0_i32, %arg2 : i32, i32, i32, i32
  }
  func.func @transform_2(%arg0: i32, %arg1: i32, %arg2: i32, %arg3: i32) -> (i32, i32, i32, i32) {
    %c0_i32 = arith.constant 0 : i32
    %c0_i32_0 = arith.constant 0 : i32
    %c0_i32_1 = arith.constant 0 : i32
    return %arg1, %c0_i32, %c0_i32_0, %arg2 : i32, i32, i32, i32
  }
  func.func @transform_3(%arg0: i32, %arg1: i32, %arg2: i32, %arg3: i32) -> (i32, i32, i32, i32) {
    %c0_i32 = arith.constant 0 : i32
    %c0_i32_0 = arith.constant 0 : i32
    %c0_i32_1 = arith.constant 0 : i32
    return %arg1, %c0_i32, %c0_i32_0, %arg2 : i32, i32, i32, i32
  }
  func.func @transform_4(%arg0: i32, %arg1: i32, %arg2: i32, %arg3: i32) -> (i32, i32, i32, i32) {
    %c1_i32 = arith.constant 1 : i32
    %0 = arith.muli %arg0, %c1_i32 : i32
    %1 = arith.addi %0, %arg3 : i32
    %c0_i32 = arith.constant 0 : i32
    %c0_i32_0 = arith.constant 0 : i32
    return %arg1, %1, %c0_i32, %arg2 : i32, i32, i32, i32
  }
  func.func @transform_5(%arg0: i32, %arg1: i32, %arg2: i32, %arg3: i32) -> (i32, i32, i32, i32) {
    %c1_i32 = arith.constant 1 : i32
    %0 = arith.muli %arg0, %c1_i32 : i32
    %1 = arith.addi %0, %arg3 : i32
    %c0_i32 = arith.constant 0 : i32
    %c0_i32_0 = arith.constant 0 : i32
    return %arg1, %1, %c0_i32, %arg2 : i32, i32, i32, i32
  }
}

</mosaic_0001>

<llo_original>
// kernel: tpu_custom_call.1
$region0: #{tpu_custom_call.1}
  #allocation0 [shape = 'u32[]', space=smem, size = 0x4, offset = 0x4, fixed_abs, tag = 'smem constant byte address 0x4 - core index']
  #allocation1 [shape = 'u32[144,128]{1,0:T(1,128)}', space=vmem, size = 0x12000, scoped, tag = 'internal scratch']
  %s0 = inlined_call_operand.hbm [shape: f32[4,2,4,128], index: 0, kind: input, shape index: {}]
  %s1 = inlined_call_operand.hbm [shape: f32[4,2,4,128], index: 1, kind: input, shape index: {}]
  %s2 = inlined_call_operand.hbm [shape: bf16[4,4,4,128], index: 2, kind: input, shape index: {}]
  %s3 = inlined_call_operand.hbm [shape: bf16[4,4,4,128], index: 3, kind: input, shape index: {}]
  %s4 = inlined_call_operand.hbm [shape: f32[4,2,4,128], index: 4, kind: output, shape index: {0}]
  %s5 = inlined_call_operand.hbm [shape: f32[4,2,4,128], index: 5, kind: output, shape index: {1}]
  %6 = xla_tuple %s4, %s5
  %s7 = sld [smem:[#allocation0]]
  $region73: #{tpu_custom_call.1} parent=0
    _
  %s9 = ssub.s32 1, %s7
  %s10 = scalar_select 0, %s9, %s7
  $region1: #{tpu_custom_call.1} parent=0
    #allocation2 [shape = 'u8[8192]{0}', space=vmem, size = 0x2000, scoped, tag = 'input window, operand 0']
    #allocation3 [shape = 's32[2]{0}', space=sflag, size = 0x8, scoped, tag = 'scoped memory for tpu_custom_call.1']
    #allocation4 [shape = 's32[2]{0}', space=sflag, size = 0x8, scoped, tag = 'scoped memory for tpu_custom_call.1']
    #allocation5 [shape = 'u8[8192]{0}', space=vmem, size = 0x2000, scoped, tag = 'input window, operand 1']
    #allocation6 [shape = 's32[2]{0}', space=sflag, size = 0x8, scoped, tag = 'scoped memory for tpu_custom_call.1']
    #allocation7 [shape = 'u8[8192]{0}', space=vmem, size = 0x2000, scoped, tag = 'input window, operand 2']
    #allocation8 [shape = 'u8[8192]{0}', space=vmem, size = 0x2000, scoped, tag = 'input window, operand 3']
    #allocation9 [shape = 's32[2]{0}', space=sflag, size = 0x8, scoped, tag = 'scoped memory for tpu_custom_call.1']
    #allocation10 [shape = 'u8[8192]{0}', space=vmem, size = 0x2000, scoped, tag = 'output window, operand 0']
    #allocation11 [shape = 'u8[8192]{0}', space=vmem, size = 0x2000, scoped, tag = 'output window, operand 1']
    #allocation12 [shape = 's32[2]{0}', space=sflag, size = 0x8, scoped, tag = 'scoped memory for tpu_custom_call.1']
    %11 = vsyncpa [#allocation3], 0
    %s12 = scalar_lea.sflag [#allocation3], 1
    %13 = vsyncpa %s12, 0
    %14 = vsyncpa [#allocation6], 0
    %s15 = scalar_lea.sflag [#allocation6], 1
    %16 = vsyncpa %s15, 0
    %17 = vsyncpa [#allocation9], 0
    %s18 = scalar_lea.sflag [#allocation9], 1
    %19 = vsyncpa %s18, 0
    %20 = vsyncpa [#allocation4], 0
    %s21 = scalar_lea.sflag [#allocation4], 1
    %22 = vsyncpa %s21, 0
    %23 = vsyncpa [#allocation12], 0
    %s24 = scalar_lea.sflag [#allocation12], 1
    %25 = vsyncpa %s24, 0
    loop: start=0, step=1, limit=6
    $region2: #{tpu_custom_call.1} parent=1 // loop_pre_header
      _
    $region3: #{tpu_custom_call.1} parent=1 // loop_header
      %s27 = sphi 0, %s31
      %p28 = scmp.ge.s32.totalorder %s27, 6
      %s34 = sphi 0, %s60
      %s35 = sphi 0, %s56
      %s36 = sphi 0, %s52
      %s37 = sphi 0, %s48
      %s38 = sphi 0, %s34
      %s39 = sphi 0, %s35
      %s40 = sphi 0, %s36
      %s41 = sphi 0, %s37
      %s42 = sphi 0, %s38
      %s43 = sphi 0, %s39
      %s44 = sphi 0, %s40
      %s45 = sphi 0, %s41
      %s69 = sphi 0, %s71
      %s72 = sphi 0, %s69
      %s73 = sphi 0, %s72
      %s89 = sphi 0, %s73
      %s101 = sphi 0, %s103
      %s104 = sphi 0, %s101
      %s105 = sphi 0, %s104
      %s121 = sphi 0, %s105
      %s129 = sphi 0, %s131
      %s132 = sphi 0, %s129
      %s133 = sphi 0, %s132
      %s149 = sphi 0, %s133
      %s157 = sphi 0, %s159
      %s160 = sphi 0, %s157
      %s161 = sphi 0, %s160
      %s177 = sphi 0, %s161
      %s189 = sphi 0, %s191
      %s192 = sphi 0, %s189
      %s193 = sphi 0, %s192
      %s209 = sphi 0, %s193
      %s221 = sphi 0, %s223
      %s224 = sphi 0, %s221
      %s225 = sphi 0, %s224
      %s241 = sphi 0, %s225
    $region4: #{tpu_custom_call.1} parent=1 // loop_header_branch
      %30 = sbr.rel (%p28) target = $region8
    $region5: #{tpu_custom_call.1} parent=1 // loop_body
      %s32 = ssub.s32 %s27, 1
      %s33 = ssub.s32 %s27, 2
      %s46 = sadd.s32 1, %s37
      %p47 = scmp.ge.s32.totalorder %s46, 1
      %s48 = scalar_select %p47, 0, %s46
      %s49 = sadd.s32 1, %s36
      %s50 = scalar_select %p47, %s49, %s36
      %p51 = scmp.ge.s32.totalorder %s50, 1
      %s52 = scalar_select %p51, 0, %s50
      %s53 = sadd.s32 1, %s35
      %s54 = scalar_select %p51, %s53, %s35
      %p55 = scmp.ge.s32.totalorder %s54, 4
      %s56 = scalar_select %p55, 0, %s54
      %s57 = sadd.s32 1, %s34
      %s58 = scalar_select %p55, %s57, %s34
      %p59 = scmp.ge.s32.totalorder %s58, 1
      %s60 = scalar_select %p59, 0, %s58
      %s61 = sadd.s32 %s34, %s37
      %s62 = sadd.s32 %s60, %s48
      %s63 = ssub.s32 %s35, %s56
      %s64 = ssub.s32 %s61, %s62
      %s65 = sor.u32 %s63, %s64
      %s66 = ssub.s32 %s36, %s52
      %s67 = sor.u32 %s65, %s66
      %p68 = scmp.eq.s32.totalorder %s67, 0
      %s70 = sadd.s32 %s69, 1
      %s71 = scalar_select %p68, %s69, %s70
      %p74 = pneg %p68
      %p75 = scmp.eq.s32.totalorder %s27, 3
      %p76 = por %p74, %p75
      %p77 = scmp.ne.s32.totalorder %s69, %s72
      %p78 = scmp.eq.s32.totalorder %s27, 0
      %p79 = por %p77, %p78
      %p80 = scmp.ne.s32.totalorder %s69, %s72
      %p81 = scmp.eq.s32.totalorder %s32, 3
      %p82 = por %p80, %p81
      %p83 = scmp.ne.s32.totalorder %s72, %s73
      %p84 = scmp.eq.s32.totalorder %s32, 0
      %p85 = por %p83, %p84
      %p86 = scmp.ne.s32.totalorder %s72, %s73
      %p87 = scmp.eq.s32.totalorder %s33, 3
      %p88 = por %p86, %p87
      %p90 = scmp.ne.s32.totalorder %s73, %s89
      %p91 = scmp.eq.s32.totalorder %s33, 0
      %p92 = por %p90, %p91
      %s93 = sadd.s32 %s34, %s37
      %s94 = sadd.s32 %s60, %s48
      %s95 = ssub.s32 %s35, %s56
      %s96 = ssub.s32 %s93, %s94
      %s97 = sor.u32 %s95, %s96
      %s98 = ssub.s32 %s36, %s52
      %s99 = sor.u32 %s97, %s98
      %p100 = scmp.eq.s32.totalorder %s99, 0
      %s102 = sadd.s32 %s101, 1
      %s103 = scalar_select %p100, %s101, %s102
      %p106 = pneg %p100
      %p107 = scmp.eq.s32.totalorder %s27, 3
      %p108 = por %p106, %p107
      %p109 = scmp.ne.s32.totalorder %s101, %s104
      %p110 = scmp.eq.s32.totalorder %s27, 0
      %p111 = por %p109, %p110
      %p112 = scmp.ne.s32.totalorder %s101, %s104
      %p113 = scmp.eq.s32.totalorder %s32, 3
      %p114 = por %p112, %p113
      %p115 = scmp.ne.s32.totalorder %s104, %s105
      %p116 = scmp.eq.s32.totalorder %s32, 0
      %p117 = por %p115, %p116
      %p118 = scmp.ne.s32.totalorder %s104, %s105
      %p119 = scmp.eq.s32.totalorder %s33, 3
      %p120 = por %p118, %p119
      %p122 = scmp.ne.s32.totalorder %s105, %s121
      %p123 = scmp.eq.s32.totalorder %s33, 0
      %p124 = por %p122, %p123
      %s125 = ssub.s32 %s35, %s56
      %s126 = ssub.s32 %s36, %s52
      %s127 = sor.u32 %s125, %s126
      %p128 = scmp.eq.s32.totalorder %s127, 0
      %s130 = sadd.s32 %s129, 1
      %s131 = scalar_select %p128, %s129, %s130
      %p134 = pneg %p128
      %p135 = scmp.eq.s32.totalorder %s27, 3
      %p136 = por %p134, %p135
      %p137 = scmp.ne.s32.totalorder %s129, %s132
      %p138 = scmp.eq.s32.totalorder %s27, 0
      %p139 = por %p137, %p138
      %p140 = scmp.ne.s32.totalorder %s129, %s132
      %p141 = scmp.eq.s32.totalorder %s32, 3
      %p142 = por %p140, %p141
      %p143 = scmp.ne.s32.totalorder %s132, %s133
      %p144 = scmp.eq.s32.totalorder %s32, 0
      %p145 = por %p143, %p144
      %p146 = scmp.ne.s32.totalorder %s132, %s133
      %p147 = scmp.eq.s32.totalorder %s33, 3
      %p148 = por %p146, %p147
      %p150 = scmp.ne.s32.totalorder %s133, %s149
      %p151 = scmp.eq.s32.totalorder %s33, 0
      %p152 = por %p150, %p151
      %s153 = ssub.s32 %s35, %s56
      %s154 = ssub.s32 %s36, %s52
      %s155 = sor.u32 %s153, %s154
      %p156 = scmp.eq.s32.totalorder %s155, 0
      %s158 = sadd.s32 %s157, 1
      %s159 = scalar_select %p156, %s157, %s158
      %p162 = pneg %p156
      %p163 = scmp.eq.s32.totalorder %s27, 3
      %p164 = por %p162, %p163
      %p165 = scmp.ne.s32.totalorder %s157, %s160
      %p166 = scmp.eq.s32.totalorder %s27, 0
      %p167 = por %p165, %p166
      %p168 = scmp.ne.s32.totalorder %s157, %s160
      %p169 = scmp.eq.s32.totalorder %s32, 3
      %p170 = por %p168, %p169
      %p171 = scmp.ne.s32.totalorder %s160, %s161
      %p172 = scmp.eq.s32.totalorder %s32, 0
      %p173 = por %p171, %p172
      %p174 = scmp.ne.s32.totalorder %s160, %s161
      %p175 = scmp.eq.s32.totalorder %s33, 3
      %p176 = por %p174, %p175
      %p178 = scmp.ne.s32.totalorder %s161, %s177
      %p179 = scmp.eq.s32.totalorder %s33, 0
      %p180 = por %p178, %p179
      %s181 = sadd.s32 %s34, %s37
      %s182 = sadd.s32 %s60, %s48
      %s183 = ssub.s32 %s35, %s56
      %s184 = ssub.s32 %s181, %s182
      %s185 = sor.u32 %s183, %s184
      %s186 = ssub.s32 %s36, %s52
      %s187 = sor.u32 %s185, %s186
      %p188 = scmp.eq.s32.totalorder %s187, 0
      %s190 = sadd.s32 %s189, 1
      %s191 = scalar_select %p188, %s189, %s190
      %p194 = pneg %p188
      %p195 = scmp.eq.s32.totalorder %s27, 3
      %p196 = por %p194, %p195
      %p197 = scmp.ne.s32.totalorder %s189, %s192
      %p198 = scmp.eq.s32.totalorder %s27, 0
      %p199 = por %p197, %p198
      %p200 = scmp.ne.s32.totalorder %s189, %s192
      %p201 = scmp.eq.s32.totalorder %s32, 3
      %p202 = por %p200, %p201
      %p203 = scmp.ne.s32.totalorder %s192, %s193
      %p204 = scmp.eq.s32.totalorder %s32, 0
      %p205 = por %p203, %p204
      %p206 = scmp.ne.s32.totalorder %s192, %s193
      %p207 = scmp.eq.s32.totalorder %s33, 3
      %p208 = por %p206, %p207
      %p210 = scmp.ne.s32.totalorder %s193, %s209
      %p211 = scmp.eq.s32.totalorder %s33, 0
      %p212 = por %p210, %p211
      %s213 = sadd.s32 %s34, %s37
      %s214 = sadd.s32 %s60, %s48
      %s215 = ssub.s32 %s35, %s56
      %s216 = ssub.s32 %s213, %s214
      %s217 = sor.u32 %s215, %s216
      %s218 = ssub.s32 %s36, %s52
      %s219 = sor.u32 %s217, %s218
      %p220 = scmp.eq.s32.totalorder %s219, 0
      %s222 = sadd.s32 %s221, 1
      %s223 = scalar_select %p220, %s221, %s222
      %p226 = pneg %p220
      %p227 = scmp.eq.s32.totalorder %s27, 3
      %p228 = por %p226, %p227
      %p229 = scmp.ne.s32.totalorder %s221, %s224
      %p230 = scmp.eq.s32.totalorder %s27, 0
      %p231 = por %p229, %p230
      %p232 = scmp.ne.s32.totalorder %s221, %s224
      %p233 = scmp.eq.s32.totalorder %s32, 3
      %p234 = por %p232, %p233
      %p235 = scmp.ne.s32.totalorder %s224, %s225
      %p236 = scmp.eq.s32.totalorder %s32, 0
      %p237 = por %p235, %p236
      %p238 = scmp.ne.s32.totalorder %s224, %s225
      %p239 = scmp.eq.s32.totalorder %s33, 3
      %p240 = por %p238, %p239
      %p242 = scmp.ne.s32.totalorder %s225, %s241
      %p243 = scmp.eq.s32.totalorder %s33, 0
      %p244 = por %p242, %p243
      %p245 = scmp.le.s32.totalorder 1, %s27
      %p246 = scmp.lt.s32.totalorder %s27, 5
      %p247 = pnand %p245, %p246
      %p248 = pneg %p247
      // Predicated region
      $region9: #{tpu_custom_call.1} parent=5 // pred_check
        _
      $region10: #{tpu_custom_call.1} parent=5 // pred_check_branch
        %250 = sbr.rel (%p247) target = $region12
      $region11: #{tpu_custom_call.1} parent=5 // pred_region
        %s251 = ssub.s32 %s27, 1
      $region12: #{tpu_custom_call.1} parent=5 // pred_fallthru
        _
      %p252 = scmp.lt.s32.totalorder %s27, 4
      // Predicated region
      $region13: #{tpu_custom_call.1} parent=5 // pred_check
        %p253 = pneg %p252
      $region14: #{tpu_custom_call.1} parent=5 // pred_check_branch
        %255 = sbr.rel (%p253) target = $region16
      $region15: #{tpu_custom_call.1} parent=5 // pred_region
        // Predicated region
        $region17: #{tpu_custom_call.1} parent=15 // pred_check
          %p256 = pneg %p79
        $region18: #{tpu_custom_call.1} parent=15 // pred_check_branch
          %258 = sbr.rel (%p256) target = $region20
        $region19: #{tpu_custom_call.1} parent=15 // pred_region
          %s259 = sand.u32 %s69, 1
          %s260 = scalar_lea.sflag [#allocation3], %s259
          %s261 = sand.u32 %s69, 1
          %s262 = smul.addr %s261, 8
          %s263 = scalar_lea.vmem [#allocation2], %s262
          %s264 = sadd.s32 %s34, %s37
          %s265 = smul.u32 2, %s264
          %s267 = ssub.s32 128, 128
          %268 = vsyncadd %s260, %s267
          %s269 = sadd.s32 %s36, %s265
          %s270 = smul.addr %s35, 2
          %s271 = sadd.s32 %s269, %s270
          %s272 = smul.addr %s271, 64
          %s273 = scalar_lea.hbm %s0, %s272
          %s274 = sshll.u32 %s263, 4
          %s275 = int_to_ptr.vmem [resolvable:$true] %s274
          %280 = dma.hbm_to_vmem [thread:$0]  %s273, 128, %s275, %s260, 64, 64, 4
        $region20: #{tpu_custom_call.1} parent=15 // pred_fallthru
          _
        // Predicated region
        $region21: #{tpu_custom_call.1} parent=15 // pred_check
          %p281 = pneg %p111
        $region22: #{tpu_custom_call.1} parent=15 // pred_check_branch
          %283 = sbr.rel (%p281) target = $region24
        $region23: #{tpu_custom_call.1} parent=15 // pred_region
          %s284 = sand.u32 %s27, 1
          %s285 = scalar_lea.sflag [#allocation6], %s284
          %s286 = sand.u32 %s101, 1
          %s287 = smul.addr %s286, 8
          %s288 = scalar_lea.vmem [#allocation5], %s287
          %s289 = sadd.s32 %s34, %s37
          %s290 = smul.u32 2, %s289
          %s292 = ssub.s32 128, 128
          %293 = vsyncadd %s285, %s292
          %s294 = sadd.s32 %s36, %s290
          %s295 = smul.addr %s35, 2
          %s296 = sadd.s32 %s294, %s295
          %s297 = smul.addr %s296, 64
          %s298 = scalar_lea.hbm %s1, %s297
          %s299 = sshll.u32 %s288, 4
          %s300 = int_to_ptr.vmem [resolvable:$true] %s299
          %305 = dma.hbm_to_vmem [thread:$0]  %s298, 128, %s300, %s285, 64, 64, 4
        $region24: #{tpu_custom_call.1} parent=15 // pred_fallthru
          _
        // Predicated region
        $region25: #{tpu_custom_call.1} parent=15 // pred_check
          %p306 = pneg %p139
        $region26: #{tpu_custom_call.1} parent=15 // pred_check_branch
          %308 = sbr.rel (%p306) target = $region28
        $region27: #{tpu_custom_call.1} parent=15 // pred_region
          %s309 = sand.u32 %s27, 1
          %s310 = scalar_lea.sflag [#allocation6], %s309
          %s311 = sand.u32 %s129, 1
          %s312 = smul.addr %s311, 8
          %s313 = scalar_lea.vmem [#allocation7], %s312
          %s315 = ssub.s32 128, 128
          %316 = vsyncadd %s310, %s315
          %s317 = smul.addr %s35, 4
          %s318 = sadd.s32 %s36, %s317
          %s319 = smul.addr %s318, 32
          %s320 = scalar_lea.hbm %s2, %s319
          %s321 = sshll.u32 %s313, 4
          %s322 = int_to_ptr.vmem [resolvable:$true] %s321
          %327 = dma.hbm_to_vmem [thread:$0]  %s320, 128, %s322, %s310, 32, 32, 2
        $region28: #{tpu_custom_call.1} parent=15 // pred_fallthru
          _
        // Predicated region
        $region29: #{tpu_custom_call.1} parent=15 // pred_check
          %p328 = pneg %p167
        $region30: #{tpu_custom_call.1} parent=15 // pred_check_branch
          %330 = sbr.rel (%p328) target = $region32
        $region31: #{tpu_custom_call.1} parent=15 // pred_region
          %s331 = sand.u32 %s157, 1
          %s332 = scalar_lea.sflag [#allocation9], %s331
          %s333 = sand.u32 %s157, 1
          %s334 = smul.addr %s333, 8
          %s335 = scalar_lea.vmem [#allocation8], %s334
          %s337 = ssub.s32 128, 128
          %338 = vsyncadd %s332, %s337
          %s339 = smul.addr %s35, 4
          %s340 = sadd.s32 %s36, %s339
          %s341 = smul.addr %s340, 32
          %s342 = scalar_lea.hbm %s3, %s341
          %s343 = sshll.u32 %s335, 4
          %s344 = int_to_ptr.vmem [resolvable:$true] %s343
          %349 = dma.hbm_to_vmem [thread:$0]  %s342, 128, %s344, %s332, 32, 32, 2
        $region32: #{tpu_custom_call.1} parent=15 // pred_fallthru
          _
      $region16: #{tpu_custom_call.1} parent=5 // pred_fallthru
        _
      %p350 = scmp.le.s32.totalorder 1, %s27
      %p351 = scmp.lt.s32.totalorder %s27, 5
      %p352 = pnand %p350, %p351
      %p353 = pneg %p352
      // Predicated region
      $region33: #{tpu_custom_call.1} parent=5 // pred_check
        _
      $region34: #{tpu_custom_call.1} parent=5 // pred_check_branch
        %355 = sbr.rel (%p352) target = $region36
      $region35: #{tpu_custom_call.1} parent=5 // pred_region
        %s356 = ssub.s32 %s27, 1
        %s357 = sand.u32 %s72, 1
        %s358 = scalar_lea.sflag [#allocation3], %s357
        %s359 = sand.u32 %s72, 1
        %s360 = smul.addr %s359, 8
        %s361 = scalar_lea.vmem [#allocation2], %s360
        // Predicated region
        $region37: #{tpu_custom_call.1} parent=35 // pred_check
          %p362 = pneg %p85
        $region38: #{tpu_custom_call.1} parent=35 // pred_check_branch
          %364 = sbr.rel (%p362) target = $region40
        $region39: #{tpu_custom_call.1} parent=35 // pred_region
          %365 = dma.done %s358, 128
        $region40: #{tpu_custom_call.1} parent=35 // pred_fallthru
          _
        %s366 = sand.u32 %s32, 1
        %s367 = scalar_lea.sflag [#allocation6], %s366
        %s368 = sand.u32 %s104, 1
        %s369 = smul.addr %s368, 8
        %s370 = scalar_lea.vmem [#allocation5], %s369
        // Predicated region
        $region41: #{tpu_custom_call.1} parent=35 // pred_check
          %p371 = pneg %p117
        $region42: #{tpu_custom_call.1} parent=35 // pred_check_branch
          %373 = sbr.rel (%p371) target = $region44
        $region43: #{tpu_custom_call.1} parent=35 // pred_region
          %374 = dma.done %s367, 128
        $region44: #{tpu_custom_call.1} parent=35 // pred_fallthru
          _
        %s375 = sand.u32 %s32, 1
        %s376 = scalar_lea.sflag [#allocation6], %s375
        %s377 = sand.u32 %s132, 1
        %s378 = smul.addr %s377, 8
        %s379 = scalar_lea.vmem [#allocation7], %s378
        // Predicated region
        $region45: #{tpu_custom_call.1} parent=35 // pred_check
          %p380 = pneg %p145
        $region46: #{tpu_custom_call.1} parent=35 // pred_check_branch
          %382 = sbr.rel (%p380) target = $region48
        $region47: #{tpu_custom_call.1} parent=35 // pred_region
          %383 = dma.done %s376, 128
        $region48: #{tpu_custom_call.1} parent=35 // pred_fallthru
          _
        %s384 = sand.u32 %s160, 1
        %s385 = scalar_lea.sflag [#allocation9], %s384
        %s386 = sand.u32 %s160, 1
        %s387 = smul.addr %s386, 8
        %s388 = scalar_lea.vmem [#allocation8], %s387
        // Predicated region
        $region49: #{tpu_custom_call.1} parent=35 // pred_check
          %p389 = pneg %p173
        $region50: #{tpu_custom_call.1} parent=35 // pred_check_branch
          %391 = sbr.rel (%p389) target = $region52
        $region51: #{tpu_custom_call.1} parent=35 // pred_region
          %392 = dma.done %s385, 128
        $region52: #{tpu_custom_call.1} parent=35 // pred_fallthru
          _
        %s393 = sand.u32 %s72, 1
        %s394 = scalar_lea.sflag [#allocation3], %s393
        %s395 = sand.u32 %s72, 1
        %s396 = smul.addr %s395, 8
        %s397 = scalar_lea.vmem [#allocation2], %s396
        %p398 = pneg %p85
        %p399 = pneg %p82
        %s400 = sand.u32 %s32, 1
        %s401 = scalar_lea.sflag [#allocation6], %s400
        %s402 = sand.u32 %s104, 1
        %s403 = smul.addr %s402, 8
        %s404 = scalar_lea.vmem [#allocation5], %s403
        %p405 = pneg %p117
        %p406 = pneg %p114
        %s407 = sand.u32 %s32, 1
        %s408 = scalar_lea.sflag [#allocation6], %s407
        %s409 = sand.u32 %s132, 1
        %s410 = smul.addr %s409, 8
        %s411 = scalar_lea.vmem [#allocation7], %s410
        %p412 = pneg %p145
        %p413 = pneg %p142
        %s414 = sand.u32 %s160, 1
        %s415 = scalar_lea.sflag [#allocation9], %s414
        %s416 = sand.u32 %s160, 1
        %s417 = smul.addr %s416, 8
        %s418 = scalar_lea.vmem [#allocation8], %s417
        %p419 = pneg %p173
        %p420 = pneg %p170
        %p421 = pneg %p205
        %p422 = pneg %p202
        %s423 = sand.u32 %s192, 1
        %s424 = scalar_lea.sflag [#allocation4], %s423
        %s425 = sand.u32 %s192, 1
        %s426 = smul.addr %s425, 8
        %s427 = scalar_lea.vmem [#allocation10], %s426
        %p428 = pneg %p237
        %p429 = pneg %p234
        %s430 = sand.u32 %s224, 1
        %s431 = scalar_lea.sflag [#allocation12], %s430
        %s432 = sand.u32 %s224, 1
        %s433 = smul.addr %s432, 8
        %s434 = scalar_lea.vmem [#allocation11], %s433
        %s435 = sadd.s32 %s38, %s41
        %s436 = smul.u32 2, %s435
        %s437 = sadd.s32 %s38, %s41
        %s438 = smul.u32 2, %s437
        %s439 = sadd.s32 %s38, %s41
        %s440 = smul.u32 2, %s439
        %s441 = sadd.s32 %s38, %s41
        %s442 = smul.u32 2, %s441
        %v443 = vld [vmem:[%s361] sm:$0x1]
        %v444 = vld [vmem:[%s361 + $0x4] sm:$0x1]
        %v445 = vld [vmem:[%s370] sm:$0x1]
        %v446 = vld [vmem:[%s370 + $0x4] sm:$0x1]
        %v447 = vld [vmem:[%s379] sm:$0x3]
        %v448 = vld [vmem:[%s388] sm:$0x3]
        %v449 = vunpack.c.l.bf16 %v447
        %v450 = vunpack.c.l.bf16 %v448
        %v451 = vlaneseq
        %v452 = vshrl.u32 %v451, 7
        %v453 = vsub.s32 0, %v452
        %v454 = vrot.slane %v443, %v453
        %v455 = vlaneseq
        %v456 = vshrl.u32 %v455, 7
        %v457 = vsub.s32 0, %v456
        %v458 = vrot.slane %v444, %v457
        %v459 = vmul.f32 %v454, %v449
        %v460 = vmul.f32 %v458, %v449
        %v461 = vlaneseq
        %v462 = vshrl.u32 %v461, 7
        %v463 = vsub.s32 0, %v462
        %v464 = vrot.slane %v445, %v463
        %v465 = vlaneseq
        %v466 = vshrl.u32 %v465, 7
        %v467 = vsub.s32 0, %v466
        %v468 = vrot.slane %v446, %v467
        %v469 = vmul.f32 %v464, %v450
        %v470 = vmul.f32 %v468, %v450
        %v471 = vsub.f32 %v459, %v469
        %v472 = vsub.f32 %v460, %v470
        %v473 = vadd.f32 %v471, 0.0
        %v474 = vadd.f32 %v472, 0.0
        %v475 = vmul.f32 %v454, %v450
        %v476 = vmul.f32 %v458, %v450
        %v477 = vmul.f32 %v464, %v449
        %v478 = vmul.f32 %v468, %v449
        %v479 = vadd.f32 %v475, %v477
        %v480 = vadd.f32 %v476, %v478
        %v481 = vadd.f32 %v479, 0.0
        %v482 = vadd.f32 %v480, 0.0
        %v483 = vld [vmem:[%s361 + $0x1] sm:$0x1]
        %v484 = vld [vmem:[%s361 + $0x5] sm:$0x1]
        %v485 = vld [vmem:[%s370 + $0x1] sm:$0x1]
        %v486 = vld [vmem:[%s370 + $0x5] sm:$0x1]
        %s487 = scalar_lea.vmem %s379, 2 [#allocation7]
        %v488 = vld [vmem:[%s487] sm:$0x3]
        %s489 = scalar_lea.vmem %s388, 2 [#allocation8]
        %v490 = vld [vmem:[%s489] sm:$0x3]
        %v491 = vunpack.c.l.bf16 %v488
        %v492 = vunpack.c.l.bf16 %v490
        %v493 = vlaneseq
        %v494 = vshrl.u32 %v493, 7
        %v495 = vsub.s32 0, %v494
        %v496 = vrot.slane %v483, %v495
        %v497 = vlaneseq
        %v498 = vshrl.u32 %v497, 7
        %v499 = vsub.s32 0, %v498
        %v500 = vrot.slane %v484, %v499
        %v501 = vmul.f32 %v496, %v491
        %v502 = vmul.f32 %v500, %v491
        %v503 = vlaneseq
        %v504 = vshrl.u32 %v503, 7
        %v505 = vsub.s32 0, %v504
        %v506 = vrot.slane %v485, %v505
        %v507 = vlaneseq
        %v508 = vshrl.u32 %v507, 7
        %v509 = vsub.s32 0, %v508
        %v510 = vrot.slane %v486, %v509
        %v511 = vmul.f32 %v506, %v492
        %v512 = vmul.f32 %v510, %v492
        %v513 = vsub.f32 %v501, %v511
        %v514 = vsub.f32 %v502, %v512
        %v515 = vadd.f32 %v473, %v513
        %v516 = vadd.f32 %v474, %v514
        %v517 = vmul.f32 %v496, %v492
        %v518 = vmul.f32 %v500, %v492
        %v519 = vmul.f32 %v506, %v491
        %v520 = vmul.f32 %v510, %v491
        %v521 = vadd.f32 %v517, %v519
        %v522 = vadd.f32 %v518, %v520
        %v523 = vadd.f32 %v481, %v521
        %v524 = vadd.f32 %v482, %v522
        %v525 = vld [vmem:[%s361 + $0x2] sm:$0x1]
        %v526 = vld [vmem:[%s361 + $0x6] sm:$0x1]
        %v527 = vld [vmem:[%s370 + $0x2] sm:$0x1]
        %v528 = vld [vmem:[%s370 + $0x6] sm:$0x1]
        %s529 = scalar_lea.vmem %s379, 4 [#allocation7]
        %v530 = vld [vmem:[%s529] sm:$0x3]
        %s531 = scalar_lea.vmem %s388, 4 [#allocation8]
        %v532 = vld [vmem:[%s531] sm:$0x3]
        %v533 = vunpack.c.l.bf16 %v530
        %v534 = vunpack.c.l.bf16 %v532
        %v535 = vlaneseq
        %v536 = vshrl.u32 %v535, 7
        %v537 = vsub.s32 0, %v536
        %v538 = vrot.slane %v525, %v537
        %v539 = vlaneseq
        %v540 = vshrl.u32 %v539, 7
        %v541 = vsub.s32 0, %v540
        %v542 = vrot.slane %v526, %v541
        %v543 = vmul.f32 %v538, %v533
        %v544 = vmul.f32 %v542, %v533
        %v545 = vlaneseq
        %v546 = vshrl.u32 %v545, 7
        %v547 = vsub.s32 0, %v546
        %v548 = vrot.slane %v527, %v547
        %v549 = vlaneseq
        %v550 = vshrl.u32 %v549, 7
        %v551 = vsub.s32 0, %v550
        %v552 = vrot.slane %v528, %v551
        %v553 = vmul.f32 %v548, %v534
        %v554 = vmul.f32 %v552, %v534
        %v555 = vsub.f32 %v543, %v553
        %v556 = vsub.f32 %v544, %v554
        %v557 = vadd.f32 %v515, %v555
        %v558 = vadd.f32 %v516, %v556
        %v559 = vmul.f32 %v538, %v534
        %v560 = vmul.f32 %v542, %v534
        %v561 = vmul.f32 %v548, %v533
        %v562 = vmul.f32 %v552, %v533
        %v563 = vadd.f32 %v559, %v561
        %v564 = vadd.f32 %v560, %v562
        %v565 = vadd.f32 %v523, %v563
        %v566 = vadd.f32 %v524, %v564
        %v567 = vld [vmem:[%s361 + $0x3] sm:$0x1]
        %v568 = vld [vmem:[%s361 + $0x7] sm:$0x1]
        %v569 = vld [vmem:[%s370 + $0x3] sm:$0x1]
        %v570 = vld [vmem:[%s370 + $0x7] sm:$0x1]
        %s571 = scalar_lea.vmem %s379, 6 [#allocation7]
        %v572 = vld [vmem:[%s571] sm:$0x3]
        %s573 = scalar_lea.vmem %s388, 6 [#allocation8]
        %v574 = vld [vmem:[%s573] sm:$0x3]
        %v575 = vunpack.c.l.bf16 %v572
        %v576 = vunpack.c.l.bf16 %v574
        %v577 = vlaneseq
        %v578 = vshrl.u32 %v577, 7
        %v579 = vsub.s32 0, %v578
        %v580 = vrot.slane %v567, %v579
        %v581 = vlaneseq
        %v582 = vshrl.u32 %v581, 7
        %v583 = vsub.s32 0, %v582
        %v584 = vrot.slane %v568, %v583
        %v585 = vmul.f32 %v580, %v575
        %v586 = vmul.f32 %v584, %v575
        %v587 = vlaneseq
        %v588 = vshrl.u32 %v587, 7
        %v589 = vsub.s32 0, %v588
        %v590 = vrot.slane %v569, %v589
        %v591 = vlaneseq
        %v592 = vshrl.u32 %v591, 7
        %v593 = vsub.s32 0, %v592
        %v594 = vrot.slane %v570, %v593
        %v595 = vmul.f32 %v590, %v576
        %v596 = vmul.f32 %v594, %v576
        %v597 = vsub.f32 %v585, %v595
        %v598 = vsub.f32 %v586, %v596
        %v599 = vadd.f32 %v557, %v597
        %v600 = vadd.f32 %v558, %v598
        %v601 = vmul.f32 %v580, %v576
        %v602 = vmul.f32 %v584, %v576
        %v603 = vmul.f32 %v590, %v575
        %v604 = vmul.f32 %v594, %v575
        %v605 = vadd.f32 %v601, %v603
        %v606 = vadd.f32 %v602, %v604
        %v607 = vadd.f32 %v565, %v605
        %v608 = vadd.f32 %v566, %v606
        %609 = vst [vmem:[%s427] sm:$0xf] %v599
        %610 = vst [vmem:[%s427 + $0x4] sm:$0xf] %v600
        %611 = vst [vmem:[%s434] sm:$0xf] %v607
        %612 = vst [vmem:[%s434 + $0x4] sm:$0xf] %v608
        %s613 = sand.u32 %s192, 1
        %s614 = scalar_lea.sflag [#allocation4], %s613
        %s615 = sand.u32 %s192, 1
        %s616 = smul.addr %s615, 8
        %s617 = scalar_lea.vmem [#allocation10], %s616
        %s618 = sand.u32 %s224, 1
        %s619 = scalar_lea.sflag [#allocation12], %s618
        %s620 = sand.u32 %s224, 1
        %s621 = smul.addr %s620, 8
        %s622 = scalar_lea.vmem [#allocation11], %s621
        // Predicated region
        $region53: #{tpu_custom_call.1} parent=35 // pred_check
          %p623 = pneg %p202
        $region54: #{tpu_custom_call.1} parent=35 // pred_check_branch
          %625 = sbr.rel (%p623) target = $region56
        $region55: #{tpu_custom_call.1} parent=35 // pred_region
          %s626 = sadd.s32 %s38, %s41
          %s627 = smul.u32 2, %s626
          %s629 = ssub.s32 128, 128
          %630 = vsyncadd %s614, %s629
          %s631 = sadd.s32 %s40, %s627
          %s632 = smul.addr %s39, 2
          %s633 = sadd.s32 %s631, %s632
          %s634 = smul.addr %s633, 64
          %s635 = scalar_lea.hbm %s4, %s634
          %s636 = sshll.u32 %s617, 4
          %s637 = int_to_ptr.vmem [resolvable:$true] %s636
          %642 = dma.vmem_to_hbm [thread:$0]  %s637, 128, %s635, %s614, 64, 64, 4
        $region56: #{tpu_custom_call.1} parent=35 // pred_fallthru
          _
        // Predicated region
        $region57: #{tpu_custom_call.1} parent=35 // pred_check
          %p643 = pneg %p234
        $region58: #{tpu_custom_call.1} parent=35 // pred_check_branch
          %645 = sbr.rel (%p643) target = $region60
        $region59: #{tpu_custom_call.1} parent=35 // pred_region
          %s646 = sadd.s32 %s38, %s41
          %s647 = smul.u32 2, %s646
          %s649 = ssub.s32 128, 128
          %650 = vsyncadd %s619, %s649
          %s651 = sadd.s32 %s40, %s647
          %s652 = smul.addr %s39, 2
          %s653 = sadd.s32 %s651, %s652
          %s654 = smul.addr %s653, 64
          %s655 = scalar_lea.hbm %s5, %s654
          %s656 = sshll.u32 %s622, 4
          %s657 = int_to_ptr.vmem [resolvable:$true] %s656
          %662 = dma.vmem_to_hbm [thread:$0]  %s657, 128, %s655, %s619, 64, 64, 4
        $region60: #{tpu_custom_call.1} parent=35 // pred_fallthru
          _
      $region36: #{tpu_custom_call.1} parent=5 // pred_fallthru
        _
      %p663 = scmp.le.s32.totalorder 2, %s27
      // Predicated region
      $region61: #{tpu_custom_call.1} parent=5 // pred_check
        %p664 = pneg %p663
      $region62: #{tpu_custom_call.1} parent=5 // pred_check_branch
        %666 = sbr.rel (%p664) target = $region64
      $region63: #{tpu_custom_call.1} parent=5 // pred_region
        %s667 = ssub.s32 %s27, 2
        // Predicated region
        $region65: #{tpu_custom_call.1} parent=63 // pred_check
          %p668 = pneg %p208
        $region66: #{tpu_custom_call.1} parent=63 // pred_check_branch
          %670 = sbr.rel (%p668) target = $region68
        $region67: #{tpu_custom_call.1} parent=63 // pred_region
          %s671 = sand.u32 %s193, 1
          %s672 = scalar_lea.sflag [#allocation4], %s671
          %s673 = sand.u32 %s193, 1
          %s674 = smul.addr %s673, 8
          %s675 = scalar_lea.vmem [#allocation10], %s674
          %676 = dma.done %s672, 128
        $region68: #{tpu_custom_call.1} parent=63 // pred_fallthru
          _
        // Predicated region
        $region69: #{tpu_custom_call.1} parent=63 // pred_check
          %p677 = pneg %p240
        $region70: #{tpu_custom_call.1} parent=63 // pred_check_branch
          %679 = sbr.rel (%p677) target = $region72
        $region71: #{tpu_custom_call.1} parent=63 // pred_region
          %s680 = sand.u32 %s225, 1
          %s681 = scalar_lea.sflag [#allocation12], %s680
          %s682 = sand.u32 %s225, 1
          %s683 = smul.addr %s682, 8
          %s684 = scalar_lea.vmem [#allocation11], %s683
          %685 = dma.done %s681, 128
        $region72: #{tpu_custom_call.1} parent=63 // pred_fallthru
          _
      $region64: #{tpu_custom_call.1} parent=5 // pred_fallthru
        _
    $region6: #{tpu_custom_call.1} parent=1 // loop_footer
      %s31 = sadd.s32 1, %s27
    $region7: #{tpu_custom_call.1} parent=1 // loop_footer_branch
      %26 = sbr.rel target = $region3
    $region8: #{tpu_custom_call.1} parent=1 // loop_exit
      _
    %686 = vsyncpa [#allocation3], 1
    %s687 = scalar_lea.sflag [#allocation3], 1
    %688 = vsyncpa %s687, 1
    %689 = vsyncpa [#allocation6], 1
    %s690 = scalar_lea.sflag [#allocation6], 1
    %691 = vsyncpa %s690, 1
    %692 = vsyncpa [#allocation9], 1
    %s693 = scalar_lea.sflag [#allocation9], 1
    %694 = vsyncpa %s693, 1
    %695 = vsyncpa [#allocation4], 1
    %s696 = scalar_lea.sflag [#allocation4], 1
    %697 = vsyncpa %s696, 1
    %698 = vsyncpa [#allocation12], 1
    %s699 = scalar_lea.sflag [#allocation12], 1
    %700 = vsyncpa %s699, 1

</llo_original>
